<compile_context>
chip_gen: v5e
topology: v5e:2x2
jax: 0.10.0
libtpu: 0.0.40
codegen_flags: <defaults>
</compile_context>

<pallas_src>
import jax
import jax.numpy as jnp
from jax.experimental import pallas as pl
from jax.experimental.pallas import tpu as pltpu


O_PAD = 128  # lane-dense output width (logit columns >= O are zero and sliced off)


def mlp_kernel(x_ref, w1_ref, b1_ref, w2_ref, b2_ref, w3_ref, b3_ref, o_ref):
    # x / weights are bf16; all dots accumulate in f32 on the MXU.
    x = x_ref[...]
    h1 = jnp.dot(x, w1_ref[...], preferred_element_type=jnp.float32) + b1_ref[...]
    h1 = jnp.maximum(h1, 0.0)                              # f32 elementwise
    h2 = jnp.dot(h1.astype(jnp.bfloat16), w2_ref[...],
                 preferred_element_type=jnp.float32) + b2_ref[...]
    h2 = jnp.maximum(h2, 0.0)
    logits = jnp.dot(h2.astype(jnp.bfloat16), w3_ref[...],
                     preferred_element_type=jnp.float32) + b3_ref[...]
    o_ref[...] = logits.astype(o_ref.dtype)                # (tb, 128) unmasked store


def _round_up(n, m):
    return ((n + m - 1) // m) * m


def _choose_block_b(B, F, block_b=None):
    """Pick a batch tile: multiple of 8, >=2 grid steps when possible, VMEM-safe."""
    if block_b is None:
        tb = min(B, 512)
        # Prefer at least 2 grid steps so both v7x TensorCores get work.
        if tb == B and B >= 16:
            tb = _round_up(pl.cdiv(B, 2), 8)
    else:
        tb = min(block_b, B)
    tb = _round_up(max(tb, 8), 8)
    # Cap so double-buffered bf16 x tile + f32 padded output tile stay well under
    # the scoped VMEM default on every generation (16 MiB v5e, 32 MiB v6e/v7x).
    per_row_bytes = 2 * (F * 2) + 2 * (O_PAD * 4)
    max_tb = max(8, ((8 * 1024 * 1024) // per_row_bytes) // 8 * 8)
    return min(tb, max_tb)


def cls_dnn_forward(x, params, *, block_b=None):
    """ClsDNN (Net MLP) forward pass as one fused Pallas TPU kernel.

    x: [B, F] float32
    params: dict with w1 [F,H], b1 [1,H], w2 [H,H], b2 [1,H], w3 [H,O], b3 [1,O]
    returns logits [B, O] float32
    """
    B, F = x.shape
    H = params["w1"].shape[1]
    O = params["w3"].shape[1]

    tb = _choose_block_b(B, F, block_b)
    grid = (pl.cdiv(B, tb),)

    # bf16 operands for the MXU; biases stay f32 (added after f32 accumulation).
    x_bf = x.astype(jnp.bfloat16)
    w1 = params["w1"].astype(jnp.bfloat16)
    w2 = params["w2"].astype(jnp.bfloat16)
    # Pad the final projection to a lane-dense 128-wide output.
    w3 = jnp.zeros((H, O_PAD), jnp.bfloat16).at[:, :O].set(
        params["w3"].astype(jnp.bfloat16))
    b1 = params["b1"].astype(jnp.float32)
    b2 = params["b2"].astype(jnp.float32)
    b3 = jnp.zeros((1, O_PAD), jnp.float32).at[:, :O].set(
        params["b3"].astype(jnp.float32))

    out_padded = pl.pallas_call(
        mlp_kernel,
        out_shape=jax.ShapeDtypeStruct((B, O_PAD), jnp.float32),
        grid_spec=pltpu.PrefetchScalarGridSpec(
            num_scalar_prefetch=0,
            grid=grid,
            in_specs=[
                pl.BlockSpec((tb, F), lambda i: (i, 0)),       # x tile over batch
                pl.BlockSpec((F, H), lambda i: (0, 0)),        # w1 (resident)
                pl.BlockSpec((1, H), lambda i: (0, 0)),        # b1
                pl.BlockSpec((H, H), lambda i: (0, 0)),        # w2
                pl.BlockSpec((1, H), lambda i: (0, 0)),        # b2
                pl.BlockSpec((H, O_PAD), lambda i: (0, 0)),    # w3 (padded)
                pl.BlockSpec((1, O_PAD), lambda i: (0, 0)),    # b3 (padded)
            ],
            out_specs=pl.BlockSpec((tb, O_PAD), lambda i: (i, 0)),
        ),
        compiler_params=pltpu.CompilerParams(
            dimension_semantics=("parallel",),
            vmem_limit_bytes=32 * 1024 * 1024,
        ),
    )(x_bf, w1, b1, w2, b2, w3, b3)

    return out_padded[:, :O]


def init_params(key, num_features, hidden, output_dim):
    """Deterministic synthetic parameter init (PyTorch-Linear-like uniform)."""
    ks = jax.random.split(key, 6)

    def lin(kw, kb, fan_in, fan_out):
        bound = 1.0 / jnp.sqrt(fan_in)
        w = jax.random.uniform(kw, (fan_in, fan_out), jnp.float32, -bound, bound)
        b = jax.random.uniform(kb, (1, fan_out), jnp.float32, -bound, bound)
        return w, b

    w1, b1 = lin(ks[0], ks[1], num_features, hidden)
    w2, b2 = lin(ks[2], ks[3], hidden, hidden)
    w3, b3 = lin(ks[4], ks[5], hidden, output_dim)
    return {"w1": w1, "b1": b1, "w2": w2, "b2": b2, "w3": w3, "b3": b3}


def reference_forward(x, p):
    """Pure-JAX reference using the same bf16 operands + f32 accumulation."""
    xb = x.astype(jnp.bfloat16)
    w1 = p["w1"].astype(jnp.bfloat16)
    w2 = p["w2"].astype(jnp.bfloat16)
    w3 = p["w3"].astype(jnp.bfloat16)
    h1 = jnp.maximum(
        jnp.dot(xb, w1, preferred_element_type=jnp.float32) + p["b1"], 0.0)
    h2 = jnp.maximum(
        jnp.dot(h1.astype(jnp.bfloat16), w2, preferred_element_type=jnp.float32)
        + p["b2"], 0.0)
    return (jnp.dot(h2.astype(jnp.bfloat16), w3, preferred_element_type=jnp.float32)
            + p["b3"])


if __name__ == "__main__":
    key = jax.random.PRNGKey(0)
    k_x, k_p = jax.random.split(key)

    batch = 1024            # tiled into 2 x 512-row grid steps (megacore-friendly)
    num_features = 32       # len(features)
    hidden = 32
    output_dim = 3          # ClsDNN default output_dim

    x = jax.random.normal(k_x, (batch, num_features), jnp.float32)
    params = init_params(k_p, num_features, hidden, output_dim)

    logits = cls_dnn_forward(x, params)
    logits = jax.block_until_ready(logits)

    ref = reference_forward(x, params)
    assert logits.shape == (batch, output_dim)
    assert jnp.allclose(logits, ref, atol=5e-3, rtol=5e-3)
    assert bool(jnp.isfinite(logits).all())

    print("KERNEL_OK")
</pallas_src>

<mosaic_0001>
module attributes {stable_mosaic.version = 11 : i64} {
  func.func @mlp_kernel(%arg0: i32, %arg1: memref<512x32xbf16, #tpu.memory_space<vmem>>, %arg2: memref<32x32xbf16, #tpu.memory_space<vmem>>, %arg3: memref<1x32xf32, #tpu.memory_space<vmem>>, %arg4: memref<32x32xbf16, #tpu.memory_space<vmem>>, %arg5: memref<1x32xf32, #tpu.memory_space<vmem>>, %arg6: memref<32x128xbf16, #tpu.memory_space<vmem>>, %arg7: memref<1x128xf32, #tpu.memory_space<vmem>>, %arg8: memref<512x128xf32, #tpu.memory_space<vmem>>) attributes {dimension_semantics = [#tpu.dimension_semantics<parallel>], iteration_bounds = array<i64: 2>, scalar_prefetch = 0 : i64, scratch_operands = 0 : i64, tpu.core_type = #tpu.core_type<tc>, window_params = [{transform_indices = @transform_0, window_bounds = array<i64: 512, 32>}, {pipeline_mode = #tpu.pipeline_mode<synchronous>, transform_indices = @transform_1, window_bounds = array<i64: 32, 32>}, {pipeline_mode = #tpu.pipeline_mode<synchronous>, transform_indices = @transform_2, window_bounds = array<i64: 1, 32>}, {pipeline_mode = #tpu.pipeline_mode<synchronous>, transform_indices = @transform_3, window_bounds = array<i64: 32, 32>}, {pipeline_mode = #tpu.pipeline_mode<synchronous>, transform_indices = @transform_4, window_bounds = array<i64: 1, 32>}, {pipeline_mode = #tpu.pipeline_mode<synchronous>, transform_indices = @transform_5, window_bounds = array<i64: 32, 128>}, {pipeline_mode = #tpu.pipeline_mode<synchronous>, transform_indices = @transform_6, window_bounds = array<i64: 1, 128>}, {transform_indices = @transform_7, window_bounds = array<i64: 512, 128>}]} {
    %c0 = arith.constant 0 : index
    %c0_0 = arith.constant 0 : index
    %0 = vector.load %arg1[%c0, %c0_0] : memref<512x32xbf16, #tpu.memory_space<vmem>>, vector<512x32xbf16>
    %c0_1 = arith.constant 0 : index
    %c0_2 = arith.constant 0 : index
    %1 = vector.load %arg2[%c0_1, %c0_2] : memref<32x32xbf16, #tpu.memory_space<vmem>>, vector<32x32xbf16>
    %cst = arith.constant dense<0.000000e+00> : vector<512x32xf32>
    %2 = tpu.matmul %0, %1, %cst {dimension_numbers = #tpu.dot_dimension_numbers<[1], [0], [0], [1], [0, 0, 1, 1], [], []>} : vector<512x32xbf16>, vector<32x32xbf16>, vector<512x32xf32> -> vector<512x32xf32>
    %c0_3 = arith.constant 0 : index
    %c0_4 = arith.constant 0 : index
    %3 = vector.load %arg3[%c0_3, %c0_4] : memref<1x32xf32, #tpu.memory_space<vmem>>, vector<1x32xf32>
    %4 = vector.broadcast %3 : vector<1x32xf32> to vector<512x32xf32>
    %5 = arith.addf %2, %4 : vector<512x32xf32>
    %cst_5 = arith.constant 0.000000e+00 : f32
    %6 = vector.broadcast %cst_5 : f32 to vector<512x32xf32>
    %7 = arith.maximumf %5, %6 : vector<512x32xf32>
    %8 = arith.truncf %7 : vector<512x32xf32> to vector<512x32xbf16>
    %c0_6 = arith.constant 0 : index
    %c0_7 = arith.constant 0 : index
    %9 = vector.load %arg4[%c0_6, %c0_7] : memref<32x32xbf16, #tpu.memory_space<vmem>>, vector<32x32xbf16>
    %cst_8 = arith.constant dense<0.000000e+00> : vector<512x32xf32>
    %10 = tpu.matmul %8, %9, %cst_8 {dimension_numbers = #tpu.dot_dimension_numbers<[1], [0], [0], [1], [0, 0, 1, 1], [], []>} : vector<512x32xbf16>, vector<32x32xbf16>, vector<512x32xf32> -> vector<512x32xf32>
    %c0_9 = arith.constant 0 : index
    %c0_10 = arith.constant 0 : index
    %11 = vector.load %arg5[%c0_9, %c0_10] : memref<1x32xf32, #tpu.memory_space<vmem>>, vector<1x32xf32>
    %12 = vector.broadcast %11 : vector<1x32xf32> to vector<512x32xf32>
    %13 = arith.addf %10, %12 : vector<512x32xf32>
    %cst_11 = arith.constant 0.000000e+00 : f32
    %14 = vector.broadcast %cst_11 : f32 to vector<512x32xf32>
    %15 = arith.maximumf %13, %14 : vector<512x32xf32>
    %16 = arith.truncf %15 : vector<512x32xf32> to vector<512x32xbf16>
    %c0_12 = arith.constant 0 : index
    %c0_13 = arith.constant 0 : index
    %17 = vector.load %arg6[%c0_12, %c0_13] : memref<32x128xbf16, #tpu.memory_space<vmem>>, vector<32x128xbf16>
    %cst_14 = arith.constant dense<0.000000e+00> : vector<512x128xf32>
    %18 = tpu.matmul %16, %17, %cst_14 {dimension_numbers = #tpu.dot_dimension_numbers<[1], [0], [0], [1], [0, 0, 1, 1], [], []>} : vector<512x32xbf16>, vector<32x128xbf16>, vector<512x128xf32> -> vector<512x128xf32>
    %c0_15 = arith.constant 0 : index
    %c0_16 = arith.constant 0 : index
    %19 = vector.load %arg7[%c0_15, %c0_16] : memref<1x128xf32, #tpu.memory_space<vmem>>, vector<1x128xf32>
    %20 = vector.broadcast %19 : vector<1x128xf32> to vector<512x128xf32>
    %21 = arith.addf %18, %20 : vector<512x128xf32>
    %c0_17 = arith.constant 0 : index
    %c0_18 = arith.constant 0 : index
    %22 = vector.load %arg8[%c0_17, %c0_18] : memref<512x128xf32, #tpu.memory_space<vmem>>, vector<512x128xf32>
    tpu.vector_store %arg8[%c0_17, %c0_18], %21 {strides = array<i32>} : memref<512x128xf32, #tpu.memory_space<vmem>>, vector<512x128xf32>,
    return
  }
  func.func @transform_0(%arg0: i32) -> (i32, i32) {
    %c0_i32 = arith.constant 0 : i32
    %c0_i32_0 = arith.constant 0 : i32
    return %arg0, %c0_i32 : i32, i32
  }
  func.func @transform_1(%arg0: i32) -> (i32, i32) {
    %c0_i32 = arith.constant 0 : i32
    %c0_i32_0 = arith.constant 0 : i32
    %c0_i32_1 = arith.constant 0 : i32
    return %c0_i32, %c0_i32_0 : i32, i32
  }
  func.func @transform_2(%arg0: i32) -> (i32, i32) {
    %c0_i32 = arith.constant 0 : i32
    %c0_i32_0 = arith.constant 0 : i32
    %c0_i32_1 = arith.constant 0 : i32
    return %c0_i32, %c0_i32_0 : i32, i32
  }
  func.func @transform_3(%arg0: i32) -> (i32, i32) {
    %c0_i32 = arith.constant 0 : i32
    %c0_i32_0 = arith.constant 0 : i32
    %c0_i32_1 = arith.constant 0 : i32
    return %c0_i32, %c0_i32_0 : i32, i32
  }
  func.func @transform_4(%arg0: i32) -> (i32, i32) {
    %c0_i32 = arith.constant 0 : i32
    %c0_i32_0 = arith.constant 0 : i32
    %c0_i32_1 = arith.constant 0 : i32
    return %c0_i32, %c0_i32_0 : i32, i32
  }
  func.func @transform_5(%arg0: i32) -> (i32, i32) {
    %c0_i32 = arith.constant 0 : i32
    %c0_i32_0 = arith.constant 0 : i32
    %c0_i32_1 = arith.constant 0 : i32
    return %c0_i32, %c0_i32_0 : i32, i32
  }
  func.func @transform_6(%arg0: i32) -> (i32, i32) {
    %c0_i32 = arith.constant 0 : i32
    %c0_i32_0 = arith.constant 0 : i32
    %c0_i32_1 = arith.constant 0 : i32
    return %c0_i32, %c0_i32_0 : i32, i32
  }
  func.func @transform_7(%arg0: i32) -> (i32, i32) {
    %c0_i32 = arith.constant 0 : i32
    %c0_i32_0 = arith.constant 0 : i32
    return %arg0, %c0_i32 : i32, i32
  }
}

</mosaic_0001>

<llo_original>
// kernel: tpu_custom_call.1
$region0: #{tpu_custom_call.1}
  #allocation0 [shape = 'u32[]', space=smem, size = 0x4, offset = 0x4, fixed_abs, tag = 'smem constant byte address 0x4 - core index']
  #allocation1 [shape = 'u32[72,128]{1,0:T(1,128)}', space=vmem, size = 0x9000, scoped, tag = 'internal scratch']
  %s0 = inlined_call_operand.vmem [shape: bf16[1024,32], index: 0, kind: input, shape index: {}]
  %s1 = inlined_call_operand.vmem [shape: bf16[32,32], index: 1, kind: input, shape index: {}]
  %s2 = inlined_call_operand.vmem [shape: f32[1,32], index: 2, kind: input, shape index: {}]
  %s3 = inlined_call_operand.vmem [shape: bf16[32,32], index: 3, kind: input, shape index: {}]
  %s4 = inlined_call_operand.vmem [shape: f32[1,32], index: 4, kind: input, shape index: {}]
  %s5 = inlined_call_operand.vmem [shape: bf16[32,128], index: 5, kind: input, shape index: {}]
  %s6 = inlined_call_operand.vmem [shape: f32[1,128], index: 6, kind: input, shape index: {}]
  %s7 = inlined_call_operand.hbm [shape: f32[1024,128], index: 7, kind: output, shape index: {}]
  %s8 = sld [smem:[#allocation0]]
  $region61: #{tpu_custom_call.1} parent=0
    _
  %s10 = ssub.s32 1, %s8
  %s11 = scalar_select 0, %s10, %s8
  $region1: #{tpu_custom_call.1} parent=0
    #allocation2 [shape = 'u8[524288]{0}', space=vmem, size = 0x80000, scoped, tag = 'output window, operand 0']
    #allocation3 [shape = 's32[2]{0}', space=sflag, size = 0x8, scoped, tag = 'scoped memory for tpu_custom_call.1']
    %12 = vsyncpa [#allocation3], 0
    %s13 = scalar_lea.sflag [#allocation3], 1
    %14 = vsyncpa %s13, 0
    loop: start=0, step=1, limit=4
    $region2: #{tpu_custom_call.1} parent=1 // loop_pre_header
      _
    $region3: #{tpu_custom_call.1} parent=1 // loop_header
      %s16 = sphi 0, %s20
      %p17 = scmp.ge.s32.totalorder %s16, 4
      %s26 = sphi 0, %s28
      %s29 = sphi 0, %s26
      %s30 = sphi 0, %s29
      %s46 = sphi 0, %s30
      %s50 = sphi 0, %s50
      %s52 = sphi 0, %s50
      %s53 = sphi 0, %s52
      %s67 = sphi 0, %s53
      %s71 = sphi 0, %s71
      %s73 = sphi 0, %s71
      %s74 = sphi 0, %s73
      %s88 = sphi 0, %s74
      %s92 = sphi 0, %s92
      %s94 = sphi 0, %s92
      %s95 = sphi 0, %s94
      %s109 = sphi 0, %s95
      %s113 = sphi 0, %s113
      %s115 = sphi 0, %s113
      %s116 = sphi 0, %s115
      %s130 = sphi 0, %s116
      %s134 = sphi 0, %s134
      %s136 = sphi 0, %s134
      %s137 = sphi 0, %s136
      %s151 = sphi 0, %s137
      %s155 = sphi 0, %s155
      %s157 = sphi 0, %s155
      %s158 = sphi 0, %s157
      %s172 = sphi 0, %s158
      %s178 = sphi 0, %s180
      %s181 = sphi 0, %s178
      %s182 = sphi 0, %s181
      %s198 = sphi 0, %s182
    $region4: #{tpu_custom_call.1} parent=1 // loop_header_branch
      %19 = sbr.rel (%p17) target = $region8
    $region5: #{tpu_custom_call.1} parent=1 // loop_body
      %s21 = ssub.s32 %s16, 1
      %s22 = ssub.s32 %s16, 2
      %s23 = sadd.s32 %s16, 1
      %s24 = ssub.s32 %s16, %s23
      %p25 = scmp.eq.s32.totalorder %s24, 0
      %s27 = sadd.s32 %s26, 1
      %s28 = scalar_select %p25, %s26, %s27
      %p31 = pneg %p25
      %p32 = scmp.eq.s32.totalorder %s16, 1
      %p33 = por %p31, %p32
      %p34 = scmp.ne.s32.totalorder %s26, %s29
      %p35 = scmp.eq.s32.totalorder %s16, 0
      %p36 = por %p34, %p35
      %p37 = scmp.ne.s32.totalorder %s26, %s29
      %p38 = scmp.eq.s32.totalorder %s21, 1
      %p39 = por %p37, %p38
      %p40 = scmp.ne.s32.totalorder %s29, %s30
      %p41 = scmp.eq.s32.totalorder %s21, 0
      %p42 = por %p40, %p41
      %p43 = scmp.ne.s32.totalorder %s29, %s30
      %p44 = scmp.eq.s32.totalorder %s22, 1
      %p45 = por %p43, %p44
      %p47 = scmp.ne.s32.totalorder %s30, %s46
      %p48 = scmp.eq.s32.totalorder %s22, 0
      %p49 = por %p47, %p48
      %s51 = sadd.s32 %s50, 1
      %p54 = scmp.eq.s32.totalorder %s16, 1
      %p55 = scmp.ne.s32.totalorder %s50, %s52
      %p56 = scmp.eq.s32.totalorder %s16, 0
      %p57 = por %p55, %p56
      %p58 = scmp.ne.s32.totalorder %s50, %s52
      %p59 = scmp.eq.s32.totalorder %s21, 1
      %p60 = por %p58, %p59
      %p61 = scmp.ne.s32.totalorder %s52, %s53
      %p62 = scmp.eq.s32.totalorder %s21, 0
      %p63 = por %p61, %p62
      %p64 = scmp.ne.s32.totalorder %s52, %s53
      %p65 = scmp.eq.s32.totalorder %s22, 1
      %p66 = por %p64, %p65
      %p68 = scmp.ne.s32.totalorder %s53, %s67
      %p69 = scmp.eq.s32.totalorder %s22, 0
      %p70 = por %p68, %p69
      %s72 = sadd.s32 %s71, 1
      %p75 = scmp.eq.s32.totalorder %s16, 1
      %p76 = scmp.ne.s32.totalorder %s71, %s73
      %p77 = scmp.eq.s32.totalorder %s16, 0
      %p78 = por %p76, %p77
      %p79 = scmp.ne.s32.totalorder %s71, %s73
      %p80 = scmp.eq.s32.totalorder %s21, 1
      %p81 = por %p79, %p80
      %p82 = scmp.ne.s32.totalorder %s73, %s74
      %p83 = scmp.eq.s32.totalorder %s21, 0
      %p84 = por %p82, %p83
      %p85 = scmp.ne.s32.totalorder %s73, %s74
      %p86 = scmp.eq.s32.totalorder %s22, 1
      %p87 = por %p85, %p86
      %p89 = scmp.ne.s32.totalorder %s74, %s88
      %p90 = scmp.eq.s32.totalorder %s22, 0
      %p91 = por %p89, %p90
      %s93 = sadd.s32 %s92, 1
      %p96 = scmp.eq.s32.totalorder %s16, 1
      %p97 = scmp.ne.s32.totalorder %s92, %s94
      %p98 = scmp.eq.s32.totalorder %s16, 0
      %p99 = por %p97, %p98
      %p100 = scmp.ne.s32.totalorder %s92, %s94
      %p101 = scmp.eq.s32.totalorder %s21, 1
      %p102 = por %p100, %p101
      %p103 = scmp.ne.s32.totalorder %s94, %s95
      %p104 = scmp.eq.s32.totalorder %s21, 0
      %p105 = por %p103, %p104
      %p106 = scmp.ne.s32.totalorder %s94, %s95
      %p107 = scmp.eq.s32.totalorder %s22, 1
      %p108 = por %p106, %p107
      %p110 = scmp.ne.s32.totalorder %s95, %s109
      %p111 = scmp.eq.s32.totalorder %s22, 0
      %p112 = por %p110, %p111
      %s114 = sadd.s32 %s113, 1
      %p117 = scmp.eq.s32.totalorder %s16, 1
      %p118 = scmp.ne.s32.totalorder %s113, %s115
      %p119 = scmp.eq.s32.totalorder %s16, 0
      %p120 = por %p118, %p119
      %p121 = scmp.ne.s32.totalorder %s113, %s115
      %p122 = scmp.eq.s32.totalorder %s21, 1
      %p123 = por %p121, %p122
      %p124 = scmp.ne.s32.totalorder %s115, %s116
      %p125 = scmp.eq.s32.totalorder %s21, 0
      %p126 = por %p124, %p125
      %p127 = scmp.ne.s32.totalorder %s115, %s116
      %p128 = scmp.eq.s32.totalorder %s22, 1
      %p129 = por %p127, %p128
      %p131 = scmp.ne.s32.totalorder %s116, %s130
      %p132 = scmp.eq.s32.totalorder %s22, 0
      %p133 = por %p131, %p132
      %s135 = sadd.s32 %s134, 1
      %p138 = scmp.eq.s32.totalorder %s16, 1
      %p139 = scmp.ne.s32.totalorder %s134, %s136
      %p140 = scmp.eq.s32.totalorder %s16, 0
      %p141 = por %p139, %p140
      %p142 = scmp.ne.s32.totalorder %s134, %s136
      %p143 = scmp.eq.s32.totalorder %s21, 1
      %p144 = por %p142, %p143
      %p145 = scmp.ne.s32.totalorder %s136, %s137
      %p146 = scmp.eq.s32.totalorder %s21, 0
      %p147 = por %p145, %p146
      %p148 = scmp.ne.s32.totalorder %s136, %s137
      %p149 = scmp.eq.s32.totalorder %s22, 1
      %p150 = por %p148, %p149
      %p152 = scmp.ne.s32.totalorder %s137, %s151
      %p153 = scmp.eq.s32.totalorder %s22, 0
      %p154 = por %p152, %p153
      %s156 = sadd.s32 %s155, 1
      %p159 = scmp.eq.s32.totalorder %s16, 1
      %p160 = scmp.ne.s32.totalorder %s155, %s157
      %p161 = scmp.eq.s32.totalorder %s16, 0
      %p162 = por %p160, %p161
      %p163 = scmp.ne.s32.totalorder %s155, %s157
      %p164 = scmp.eq.s32.totalorder %s21, 1
      %p165 = por %p163, %p164
      %p166 = scmp.ne.s32.totalorder %s157, %s158
      %p167 = scmp.eq.s32.totalorder %s21, 0
      %p168 = por %p166, %p167
      %p169 = scmp.ne.s32.totalorder %s157, %s158
      %p170 = scmp.eq.s32.totalorder %s22, 1
      %p171 = por %p169, %p170
      %p173 = scmp.ne.s32.totalorder %s158, %s172
      %p174 = scmp.eq.s32.totalorder %s22, 0
      %p175 = por %p173, %p174
      %s176 = ssub.s32 %s16, %s23
      %p177 = scmp.eq.s32.totalorder %s176, 0
      %s179 = sadd.s32 %s178, 1
      %s180 = scalar_select %p177, %s178, %s179
      %p183 = pneg %p177
      %p184 = scmp.eq.s32.totalorder %s16, 1
      %p185 = por %p183, %p184
      %p186 = scmp.ne.s32.totalorder %s178, %s181
      %p187 = scmp.eq.s32.totalorder %s16, 0
      %p188 = por %p186, %p187
      %p189 = scmp.ne.s32.totalorder %s178, %s181
      %p190 = scmp.eq.s32.totalorder %s21, 1
      %p191 = por %p189, %p190
      %p192 = scmp.ne.s32.totalorder %s181, %s182
      %p193 = scmp.eq.s32.totalorder %s21, 0
      %p194 = por %p192, %p193
      %p195 = scmp.ne.s32.totalorder %s181, %s182
      %p196 = scmp.eq.s32.totalorder %s22, 1
      %p197 = por %p195, %p196
      %p199 = scmp.ne.s32.totalorder %s182, %s198
      %p200 = scmp.eq.s32.totalorder %s22, 0
      %p201 = por %p199, %p200
      %p202 = scmp.le.s32.totalorder 1, %s16
      %p203 = scmp.lt.s32.totalorder %s16, 3
      %p204 = pnand %p202, %p203
      %p205 = pneg %p204
      // Predicated region
      $region9: #{tpu_custom_call.1} parent=5 // pred_check
        _
      $region10: #{tpu_custom_call.1} parent=5 // pred_check_branch
        %207 = sbr.rel (%p204) target = $region12
      $region11: #{tpu_custom_call.1} parent=5 // pred_region
        %s208 = ssub.s32 %s16, 1
        // Predicated region
        $region13: #{tpu_custom_call.1} parent=11 // pred_check
          %p209 = pneg %p63
        $region14: #{tpu_custom_call.1} parent=11 // pred_check_branch
          %211 = sbr.rel (%p209) target = $region16
        $region15: #{tpu_custom_call.1} parent=11 // pred_region
          _
        $region16: #{tpu_custom_call.1} parent=11 // pred_fallthru
          _
        // Predicated region
        $region17: #{tpu_custom_call.1} parent=11 // pred_check
          %p212 = pneg %p84
        $region18: #{tpu_custom_call.1} parent=11 // pred_check_branch
          %214 = sbr.rel (%p212) target = $region20
        $region19: #{tpu_custom_call.1} parent=11 // pred_region
          _
        $region20: #{tpu_custom_call.1} parent=11 // pred_fallthru
          _
        // Predicated region
        $region21: #{tpu_custom_call.1} parent=11 // pred_check
          %p215 = pneg %p105
        $region22: #{tpu_custom_call.1} parent=11 // pred_check_branch
          %217 = sbr.rel (%p215) target = $region24
        $region23: #{tpu_custom_call.1} parent=11 // pred_region
          _
        $region24: #{tpu_custom_call.1} parent=11 // pred_fallthru
          _
        // Predicated region
        $region25: #{tpu_custom_call.1} parent=11 // pred_check
          %p218 = pneg %p126
        $region26: #{tpu_custom_call.1} parent=11 // pred_check_branch
          %220 = sbr.rel (%p218) target = $region28
        $region27: #{tpu_custom_call.1} parent=11 // pred_region
          _
        $region28: #{tpu_custom_call.1} parent=11 // pred_fallthru
          _
        // Predicated region
        $region29: #{tpu_custom_call.1} parent=11 // pred_check
          %p221 = pneg %p147
        $region30: #{tpu_custom_call.1} parent=11 // pred_check_branch
          %223 = sbr.rel (%p221) target = $region32
        $region31: #{tpu_custom_call.1} parent=11 // pred_region
          _
        $region32: #{tpu_custom_call.1} parent=11 // pred_fallthru
          _
        // Predicated region
        $region33: #{tpu_custom_call.1} parent=11 // pred_check
          %p224 = pneg %p168
        $region34: #{tpu_custom_call.1} parent=11 // pred_check_branch
          %226 = sbr.rel (%p224) target = $region36
        $region35: #{tpu_custom_call.1} parent=11 // pred_region
          _
        $region36: #{tpu_custom_call.1} parent=11 // pred_fallthru
          _
      $region12: #{tpu_custom_call.1} parent=5 // pred_fallthru
        _
      %p227 = scmp.lt.s32.totalorder %s16, 2
      // Predicated region
      $region37: #{tpu_custom_call.1} parent=5 // pred_check
        %p228 = pneg %p227
      $region38: #{tpu_custom_call.1} parent=5 // pred_check_branch
        %230 = sbr.rel (%p228) target = $region40
      $region39: #{tpu_custom_call.1} parent=5 // pred_region
        // Predicated region
        $region41: #{tpu_custom_call.1} parent=39 // pred_check
          %p231 = pneg %p36
        $region42: #{tpu_custom_call.1} parent=39 // pred_check_branch
          %233 = sbr.rel (%p231) target = $region44
        $region43: #{tpu_custom_call.1} parent=39 // pred_region
          %s234 = smul.u32 64, %s16
          %p235 = scmp.lt.s32.totalorder %s234, 127
          %s236 = scalar_select %p235, %s234, 127
          %s237 = smul.addr %s236, 4
          %s238 = scalar_lea.vmem %s0, %s237
          %s239 = smul.u32 64, %s16
        $region44: #{tpu_custom_call.1} parent=39 // pred_fallthru
          _
      $region40: #{tpu_custom_call.1} parent=5 // pred_fallthru
        _
      %p240 = scmp.le.s32.totalorder 1, %s16
      %p241 = scmp.lt.s32.totalorder %s16, 3
      %p242 = pnand %p240, %p241
      %p243 = pneg %p242
      // Predicated region
      $region45: #{tpu_custom_call.1} parent=5 // pred_check
        _
      $region46: #{tpu_custom_call.1} parent=5 // pred_check_branch
        %245 = sbr.rel (%p242) target = $region48
      $region47: #{tpu_custom_call.1} parent=5 // pred_region
        %s246 = ssub.s32 %s16, 1
        %s247 = smul.u32 64, %s21
        %p248 = scmp.lt.s32.totalorder %s247, 127
        %s249 = scalar_select %p248, %s247, 127
        %s250 = smul.addr %s249, 4
        %s251 = scalar_lea.vmem %s0, %s250
        %p252 = pneg %p42
        %p253 = pneg %p39
        %p254 = pneg %p63
        %p255 = pneg %p60
        %p256 = pneg %p84
        %p257 = pneg %p81
        %p258 = pneg %p105
        %p259 = pneg %p102
        %p260 = pneg %p126
        %p261 = pneg %p123
        %p262 = pneg %p147
        %p263 = pneg %p144
        %p264 = pneg %p168
        %p265 = pneg %p165
        %p266 = pneg %p194
        %p267 = pneg %p191
        %s268 = sand.u32 %s181, 1
        %s269 = scalar_lea.sflag [#allocation3], %s268
        %s270 = sand.u32 %s181, 1
        %s271 = smul.addr %s270, 512
        %s272 = scalar_lea.vmem [#allocation2], %s271
        %s273 = smul.u32 64, %s21
        %p274 = scmp.lt.s32.totalorder %s273, 127
        %s275 = scalar_select %p274, %s273, 127
        %s276 = smul.addr %s275, 4
        %s277 = scalar_lea.vmem %s0, %s276
        %s278 = smul.u32 64, %s21
        %s279 = smul.u32 64, %s21
        %v281 = vld [vmem:[%s277] sm:$0xf]
        %v282 = vld [vmem:[%s277 + $0x4] sm:$0xf]
        %v283 = vld [vmem:[%s277 + $0x8] sm:$0xf]
        %v284 = vld [vmem:[%s277 + $0xc] sm:$0xf]
        %v285 = vld [vmem:[%s277 + $0x10] sm:$0xf]
        %v286 = vld [vmem:[%s277 + $0x14] sm:$0xf]
        %v287 = vld [vmem:[%s277 + $0x18] sm:$0xf]
        %v288 = vld [vmem:[%s277 + $0x1c] sm:$0xf]
        %v289 = vld [vmem:[%s277 + $0x20] sm:$0xf]
        %v290 = vld [vmem:[%s277 + $0x24] sm:$0xf]
        %v291 = vld [vmem:[%s277 + $0x28] sm:$0xf]
        %v292 = vld [vmem:[%s277 + $0x2c] sm:$0xf]
        %v293 = vld [vmem:[%s277 + $0x30] sm:$0xf]
        %v294 = vld [vmem:[%s277 + $0x34] sm:$0xf]
        %v295 = vld [vmem:[%s277 + $0x38] sm:$0xf]
        %v296 = vld [vmem:[%s277 + $0x3c] sm:$0xf]
        %v297 = vld [vmem:[%s277 + $0x40] sm:$0xf]
        %v298 = vld [vmem:[%s277 + $0x44] sm:$0xf]
        %v299 = vld [vmem:[%s277 + $0x48] sm:$0xf]
        %v300 = vld [vmem:[%s277 + $0x4c] sm:$0xf]
        %v301 = vld [vmem:[%s277 + $0x50] sm:$0xf]
        %v302 = vld [vmem:[%s277 + $0x54] sm:$0xf]
        %v303 = vld [vmem:[%s277 + $0x58] sm:$0xf]
        %v304 = vld [vmem:[%s277 + $0x5c] sm:$0xf]
        %v305 = vld [vmem:[%s277 + $0x60] sm:$0xf]
        %v306 = vld [vmem:[%s277 + $0x64] sm:$0xf]
        %v307 = vld [vmem:[%s277 + $0x68] sm:$0xf]
        %v308 = vld [vmem:[%s277 + $0x6c] sm:$0xf]
        %v309 = vld [vmem:[%s277 + $0x70] sm:$0xf]
        %v310 = vld [vmem:[%s277 + $0x74] sm:$0xf]
        %v311 = vld [vmem:[%s277 + $0x78] sm:$0xf]
        %v312 = vld [vmem:[%s277 + $0x7c] sm:$0xf]
        %v313 = vld [vmem:[%s277 + $0x80] sm:$0xf]
        %v314 = vld [vmem:[%s277 + $0x84] sm:$0xf]
        %v315 = vld [vmem:[%s277 + $0x88] sm:$0xf]
        %v316 = vld [vmem:[%s277 + $0x8c] sm:$0xf]
        %v317 = vld [vmem:[%s277 + $0x90] sm:$0xf]
        %v318 = vld [vmem:[%s277 + $0x94] sm:$0xf]
        %v319 = vld [vmem:[%s277 + $0x98] sm:$0xf]
        %v320 = vld [vmem:[%s277 + $0x9c] sm:$0xf]
        %v321 = vld [vmem:[%s277 + $0xa0] sm:$0xf]
        %v322 = vld [vmem:[%s277 + $0xa4] sm:$0xf]
        %v323 = vld [vmem:[%s277 + $0xa8] sm:$0xf]
        %v324 = vld [vmem:[%s277 + $0xac] sm:$0xf]
        %v325 = vld [vmem:[%s277 + $0xb0] sm:$0xf]
        %v326 = vld [vmem:[%s277 + $0xb4] sm:$0xf]
        %v327 = vld [vmem:[%s277 + $0xb8] sm:$0xf]
        %v328 = vld [vmem:[%s277 + $0xbc] sm:$0xf]
        %v329 = vld [vmem:[%s277 + $0xc0] sm:$0xf]
        %v330 = vld [vmem:[%s277 + $0xc4] sm:$0xf]
        %v331 = vld [vmem:[%s277 + $0xc8] sm:$0xf]
        %v332 = vld [vmem:[%s277 + $0xcc] sm:$0xf]
        %v333 = vld [vmem:[%s277 + $0xd0] sm:$0xf]
        %v334 = vld [vmem:[%s277 + $0xd4] sm:$0xf]
        %v335 = vld [vmem:[%s277 + $0xd8] sm:$0xf]
        %v336 = vld [vmem:[%s277 + $0xdc] sm:$0xf]
        %v337 = vld [vmem:[%s277 + $0xe0] sm:$0xf]
        %v338 = vld [vmem:[%s277 + $0xe4] sm:$0xf]
        %v339 = vld [vmem:[%s277 + $0xe8] sm:$0xf]
        %v340 = vld [vmem:[%s277 + $0xec] sm:$0xf]
        %v341 = vld [vmem:[%s277 + $0xf0] sm:$0xf]
        %v342 = vld [vmem:[%s277 + $0xf4] sm:$0xf]
        %v343 = vld [vmem:[%s277 + $0xf8] sm:$0xf]
        %v344 = vld [vmem:[%s277 + $0xfc] sm:$0xf]
        %v345 = vld [vmem:[%s1] sm:$0xf]
        %v346 = vld [vmem:[%s1 + $0x4] sm:$0xf]
        %v347 = vld [vmem:[%s1 + $0x8] sm:$0xf]
        %v348 = vld [vmem:[%s1 + $0xc] sm:$0xf]
        %v349 = vld [vmem:[%s2] sm:$0x1]
        %v351 = vperm.slane %v349, 0
        %v417 = vunpack.c.l.b16 %v281
        %v418 = vunpack.c.l.b16 %v282
        %v419 = vunpack.c.l.b16 %v283
        %v420 = vunpack.c.l.b16 %v284
        %v421 = vunpack.c.l.b16 %v285
        %v422 = vunpack.c.l.b16 %v286
        %v423 = vunpack.c.l.b16 %v287
        %v424 = vunpack.c.l.b16 %v288
        %v425 = vunpack.c.l.b16 %v289
        %v426 = vunpack.c.l.b16 %v290
        %v427 = vunpack.c.l.b16 %v291
        %v428 = vunpack.c.l.b16 %v292
        %v429 = vunpack.c.l.b16 %v293
        %v430 = vunpack.c.l.b16 %v294
        %v431 = vunpack.c.l.b16 %v295
        %v432 = vunpack.c.l.b16 %v296
        %v433 = vunpack.c.l.b16 %v297
        %v434 = vunpack.c.l.b16 %v298
        %v435 = vunpack.c.l.b16 %v299
        %v436 = vunpack.c.l.b16 %v300
        %v437 = vunpack.c.l.b16 %v301
        %v438 = vunpack.c.l.b16 %v302
        %v439 = vunpack.c.l.b16 %v303
        %v440 = vunpack.c.l.b16 %v304
        %v441 = vunpack.c.l.b16 %v305
        %v442 = vunpack.c.l.b16 %v306
        %v443 = vunpack.c.l.b16 %v307
        %v444 = vunpack.c.l.b16 %v308
        %v445 = vunpack.c.l.b16 %v309
        %v446 = vunpack.c.l.b16 %v310
        %v447 = vunpack.c.l.b16 %v311
        %v448 = vunpack.c.l.b16 %v312
        %v449 = vunpack.c.l.b16 %v313
        %v450 = vunpack.c.l.b16 %v314
        %v451 = vunpack.c.l.b16 %v315
        %v452 = vunpack.c.l.b16 %v316
        %v453 = vunpack.c.l.b16 %v317
        %v454 = vunpack.c.l.b16 %v318
        %v455 = vunpack.c.l.b16 %v319
        %v456 = vunpack.c.l.b16 %v320
        %v457 = vunpack.c.l.b16 %v321
        %v458 = vunpack.c.l.b16 %v322
        %v459 = vunpack.c.l.b16 %v323
        %v460 = vunpack.c.l.b16 %v324
        %v461 = vunpack.c.l.b16 %v325
        %v462 = vunpack.c.l.b16 %v326
        %v463 = vunpack.c.l.b16 %v327
        %v464 = vunpack.c.l.b16 %v328
        %v465 = vunpack.c.l.b16 %v329
        %v466 = vunpack.c.l.b16 %v330
        %v467 = vunpack.c.l.b16 %v331
        %v468 = vunpack.c.l.b16 %v332
        %v469 = vunpack.c.l.b16 %v333
        %v470 = vunpack.c.l.b16 %v334
        %v471 = vunpack.c.l.b16 %v335
        %v472 = vunpack.c.l.b16 %v336
        %v473 = vunpack.c.l.b16 %v337
        %v474 = vunpack.c.l.b16 %v338
        %v475 = vunpack.c.l.b16 %v339
        %v476 = vunpack.c.l.b16 %v340
        %v477 = vunpack.c.l.b16 %v341
        %v478 = vunpack.c.l.b16 %v342
        %v479 = vunpack.c.l.b16 %v343
        %v480 = vunpack.c.l.b16 %v344
        %v481 = vpack.c.b16 %v418, %v417
        %v482 = vpack.c.b16 %v420, %v419
        %v483 = vpack.c.b16 %v422, %v421
        %v484 = vpack.c.b16 %v424, %v423
        %v485 = vpack.c.b16 %v426, %v425
        %v486 = vpack.c.b16 %v428, %v427
        %v487 = vpack.c.b16 %v430, %v429
        %v488 = vpack.c.b16 %v432, %v431
        %v489 = vpack.c.b16 %v434, %v433
        %v490 = vpack.c.b16 %v436, %v435
        %v491 = vpack.c.b16 %v438, %v437
        %v492 = vpack.c.b16 %v440, %v439
        %v493 = vpack.c.b16 %v442, %v441
        %v494 = vpack.c.b16 %v444, %v443
        %v495 = vpack.c.b16 %v446, %v445
        %v496 = vpack.c.b16 %v448, %v447
        %v497 = vpack.c.b16 %v450, %v449
        %v498 = vpack.c.b16 %v452, %v451
        %v499 = vpack.c.b16 %v454, %v453
        %v500 = vpack.c.b16 %v456, %v455
        %v501 = vpack.c.b16 %v458, %v457
        %v502 = vpack.c.b16 %v460, %v459
        %v503 = vpack.c.b16 %v462, %v461
        %v504 = vpack.c.b16 %v464, %v463
        %v505 = vpack.c.b16 %v466, %v465
        %v506 = vpack.c.b16 %v468, %v467
        %v507 = vpack.c.b16 %v470, %v469
        %v508 = vpack.c.b16 %v472, %v471
        %v509 = vpack.c.b16 %v474, %v473
        %v510 = vpack.c.b16 %v476, %v475
        %v511 = vpack.c.b16 %v478, %v477
        %v512 = vpack.c.b16 %v480, %v479
        %v517 = vunpack.c.l.b16 %v345
        %v518 = vunpack.c.l.b16 %v346
        %v519 = vunpack.c.l.b16 %v347
        %v520 = vunpack.c.l.b16 %v348
        %v521 = vpack.c.b16 %v518, %v517
        %v522 = vpack.c.b16 %v520, %v519
        %vm525 = vcmask 261120
        %v527 = vsel %vm525, %v481, 0
        %v530 = vsel %vm525, %v482, 0
        %v533 = vsel %vm525, %v483, 0
        %v536 = vsel %vm525, %v484, 0
        %v539 = vsel %vm525, %v485, 0
        %v542 = vsel %vm525, %v486, 0
        %v545 = vsel %vm525, %v487, 0
        %v548 = vsel %vm525, %v488, 0
        %v551 = vsel %vm525, %v489, 0
        %v554 = vsel %vm525, %v490, 0
        %v557 = vsel %vm525, %v491, 0
        %v560 = vsel %vm525, %v492, 0
        %v563 = vsel %vm525, %v493, 0
        %v566 = vsel %vm525, %v494, 0
        %v569 = vsel %vm525, %v495, 0
        %v572 = vsel %vm525, %v496, 0
        %v575 = vsel %vm525, %v497, 0
        %v578 = vsel %vm525, %v498, 0
        %v581 = vsel %vm525, %v499, 0
        %v584 = vsel %vm525, %v500, 0
        %v587 = vsel %vm525, %v501, 0
        %v590 = vsel %vm525, %v502, 0
        %v593 = vsel %vm525, %v503, 0
        %v596 = vsel %vm525, %v504, 0
        %v599 = vsel %vm525, %v505, 0
        %v602 = vsel %vm525, %v506, 0
        %v605 = vsel %vm525, %v507, 0
        %v608 = vsel %vm525, %v508, 0
        %v611 = vsel %vm525, %v509, 0
        %v614 = vsel %vm525, %v510, 0
        %v617 = vsel %vm525, %v511, 0
        %v620 = vsel %vm525, %v512, 0
        %622 = vmatpush.bf16.msra.mxu0 0
        %623 = vmatpush.bf16.msra.mxu0 0
        %624 = vmatpush.bf16.msra.mxu0 0
        %625 = vmatpush.bf16.msra.mxu0 0
        %626 = vmatpush.bf16.msra.mxu0 0
        %627 = vmatpush.bf16.msra.mxu0 0
        %628 = vmatpush.bf16.msra.mxu0 %v522
        %629 = vmatpush.bf16.msra.mxu0 %v521
        %630 = vmatmul.bf16.gmra.mxu0 %v527
        %v631 = vpop.f32.mrf.mxu0
        %v632 = vadd.f32 %v351, %v631
        %v633 = vpop.f32.mrf.mxu0
        %v634 = vadd.f32 %v351, %v633
        %635 = vmatmul.bf16.gmra.mxu0 %v530
        %v636 = vpop.f32.mrf.mxu0
        %v637 = vadd.f32 %v351, %v636
        %v638 = vpop.f32.mrf.mxu0
        %v639 = vadd.f32 %v351, %v638
        %640 = vmatmul.bf16.gmra.mxu0 %v533
        %v641 = vpop.f32.mrf.mxu0
        %v642 = vadd.f32 %v351, %v641
        %v643 = vpop.f32.mrf.mxu0
        %v644 = vadd.f32 %v351, %v643
        %645 = vmatmul.bf16.gmra.mxu0 %v536
        %v646 = vpop.f32.mrf.mxu0
        %v647 = vadd.f32 %v351, %v646
        %v648 = vpop.f32.mrf.mxu0
        %v649 = vadd.f32 %v351, %v648
        %650 = vmatmul.bf16.gmra.mxu0 %v539
        %v651 = vpop.f32.mrf.mxu0
        %v652 = vadd.f32 %v351, %v651
        %v653 = vpop.f32.mrf.mxu0
        %v654 = vadd.f32 %v351, %v653
        %655 = vmatmul.bf16.gmra.mxu0 %v542
        %v656 = vpop.f32.mrf.mxu0
        %v657 = vadd.f32 %v351, %v656
        %v658 = vpop.f32.mrf.mxu0
        %v659 = vadd.f32 %v351, %v658
        %660 = vmatmul.bf16.gmra.mxu0 %v545
        %v661 = vpop.f32.mrf.mxu0
        %v662 = vadd.f32 %v351, %v661
        %v663 = vpop.f32.mrf.mxu0
        %v664 = vadd.f32 %v351, %v663
        %665 = vmatmul.bf16.gmra.mxu0 %v548
        %v666 = vpop.f32.mrf.mxu0
        %v667 = vadd.f32 %v351, %v666
        %v668 = vpop.f32.mrf.mxu0
        %v669 = vadd.f32 %v351, %v668
        %670 = vmatmul.bf16.gmra.mxu0 %v551
        %v671 = vpop.f32.mrf.mxu0
        %v672 = vadd.f32 %v351, %v671
        %v673 = vpop.f32.mrf.mxu0
        %v674 = vadd.f32 %v351, %v673
        %675 = vmatmul.bf16.gmra.mxu0 %v554
        %v676 = vpop.f32.mrf.mxu0
        %v677 = vadd.f32 %v351, %v676
        %v678 = vpop.f32.mrf.mxu0
        %v679 = vadd.f32 %v351, %v678
        %680 = vmatmul.bf16.gmra.mxu0 %v557
        %v681 = vpop.f32.mrf.mxu0
        %v682 = vadd.f32 %v351, %v681
        %v683 = vpop.f32.mrf.mxu0
        %v684 = vadd.f32 %v351, %v683
        %685 = vmatmul.bf16.gmra.mxu0 %v560
        %v686 = vpop.f32.mrf.mxu0
        %v687 = vadd.f32 %v351, %v686
        %v688 = vpop.f32.mrf.mxu0
        %v689 = vadd.f32 %v351, %v688
        %690 = vmatmul.bf16.gmra.mxu0 %v563
        %v691 = vpop.f32.mrf.mxu0
        %v692 = vadd.f32 %v351, %v691
        %v693 = vpop.f32.mrf.mxu0
        %v694 = vadd.f32 %v351, %v693
        %695 = vmatmul.bf16.gmra.mxu0 %v566
        %v696 = vpop.f32.mrf.mxu0
        %v697 = vadd.f32 %v351, %v696
        %v698 = vpop.f32.mrf.mxu0
        %v699 = vadd.f32 %v351, %v698
        %700 = vmatmul.bf16.gmra.mxu0 %v569
        %v701 = vpop.f32.mrf.mxu0
        %v702 = vadd.f32 %v351, %v701
        %v703 = vpop.f32.mrf.mxu0
        %v704 = vadd.f32 %v351, %v703
        %705 = vmatmul.bf16.gmra.mxu0 %v572
        %v706 = vpop.f32.mrf.mxu0
        %v707 = vadd.f32 %v351, %v706
        %v708 = vpop.f32.mrf.mxu0
        %v709 = vadd.f32 %v351, %v708
        %710 = vmatmul.bf16.gmra.mxu0 %v575
        %v711 = vpop.f32.mrf.mxu0
        %v712 = vadd.f32 %v351, %v711
        %v713 = vpop.f32.mrf.mxu0
        %v714 = vadd.f32 %v351, %v713
        %715 = vmatmul.bf16.gmra.mxu0 %v578
        %v716 = vpop.f32.mrf.mxu0
        %v717 = vadd.f32 %v351, %v716
        %v718 = vpop.f32.mrf.mxu0
        %v719 = vadd.f32 %v351, %v718
        %720 = vmatmul.bf16.gmra.mxu0 %v581
        %v721 = vpop.f32.mrf.mxu0
        %v722 = vadd.f32 %v351, %v721
        %v723 = vpop.f32.mrf.mxu0
        %v724 = vadd.f32 %v351, %v723
        %725 = vmatmul.bf16.gmra.mxu0 %v584
        %v726 = vpop.f32.mrf.mxu0
        %v727 = vadd.f32 %v351, %v726
        %v728 = vpop.f32.mrf.mxu0
        %v729 = vadd.f32 %v351, %v728
        %730 = vmatmul.bf16.gmra.mxu0 %v587
        %v731 = vpop.f32.mrf.mxu0
        %v732 = vadd.f32 %v351, %v731
        %v733 = vpop.f32.mrf.mxu0
        %v734 = vadd.f32 %v351, %v733
        %735 = vmatmul.bf16.gmra.mxu0 %v590
        %v736 = vpop.f32.mrf.mxu0
        %v737 = vadd.f32 %v351, %v736
        %v738 = vpop.f32.mrf.mxu0
        %v739 = vadd.f32 %v351, %v738
        %740 = vmatmul.bf16.gmra.mxu0 %v593
        %v741 = vpop.f32.mrf.mxu0
        %v742 = vadd.f32 %v351, %v741
        %v743 = vpop.f32.mrf.mxu0
        %v744 = vadd.f32 %v351, %v743
        %745 = vmatmul.bf16.gmra.mxu0 %v596
        %v746 = vpop.f32.mrf.mxu0
        %v747 = vadd.f32 %v351, %v746
        %v748 = vpop.f32.mrf.mxu0
        %v749 = vadd.f32 %v351, %v748
        %750 = vmatmul.bf16.gmra.mxu0 %v599
        %v751 = vpop.f32.mrf.mxu0
        %v752 = vadd.f32 %v351, %v751
        %v753 = vpop.f32.mrf.mxu0
        %v754 = vadd.f32 %v351, %v753
        %755 = vmatmul.bf16.gmra.mxu0 %v602
        %v756 = vpop.f32.mrf.mxu0
        %v757 = vadd.f32 %v351, %v756
        %v758 = vpop.f32.mrf.mxu0
        %v759 = vadd.f32 %v351, %v758
        %760 = vmatmul.bf16.gmra.mxu0 %v605
        %v761 = vpop.f32.mrf.mxu0
        %v762 = vadd.f32 %v351, %v761
        %v763 = vpop.f32.mrf.mxu0
        %v764 = vadd.f32 %v351, %v763
        %765 = vmatmul.bf16.gmra.mxu0 %v608
        %v766 = vpop.f32.mrf.mxu0
        %v767 = vadd.f32 %v351, %v766
        %v768 = vpop.f32.mrf.mxu0
        %v769 = vadd.f32 %v351, %v768
        %770 = vmatmul.bf16.gmra.mxu0 %v611
        %v771 = vpop.f32.mrf.mxu0
        %v772 = vadd.f32 %v351, %v771
        %v773 = vpop.f32.mrf.mxu0
        %v774 = vadd.f32 %v351, %v773
        %775 = vmatmul.bf16.gmra.mxu0 %v614
        %v776 = vpop.f32.mrf.mxu0
        %v777 = vadd.f32 %v351, %v776
        %v778 = vpop.f32.mrf.mxu0
        %v779 = vadd.f32 %v351, %v778
        %780 = vmatmul.bf16.gmra.mxu0 %v617
        %v781 = vpop.f32.mrf.mxu0
        %v782 = vadd.f32 %v351, %v781
        %v783 = vpop.f32.mrf.mxu0
        %v784 = vadd.f32 %v351, %v783
        %785 = vmatmul.bf16.gmra.mxu0 %v620
        %v786 = vpop.f32.mrf.mxu0
        %v787 = vadd.f32 %v351, %v786
        %v788 = vpop.f32.mrf.mxu0
        %v789 = vadd.f32 %v351, %v788
        %790 = vdwg.mxu0
        %v791 = vmax.f32 %v632, 0.0
        %v792 = vmax.f32 %v634, 0.0
        %v793 = vmax.f32 %v637, 0.0
        %v794 = vmax.f32 %v639, 0.0
        %v795 = vmax.f32 %v642, 0.0
        %v796 = vmax.f32 %v644, 0.0
        %v797 = vmax.f32 %v647, 0.0
        %v798 = vmax.f32 %v649, 0.0
        %v799 = vmax.f32 %v652, 0.0
        %v800 = vmax.f32 %v654, 0.0
        %v801 = vmax.f32 %v657, 0.0
        %v802 = vmax.f32 %v659, 0.0
        %v803 = vmax.f32 %v662, 0.0
        %v804 = vmax.f32 %v664, 0.0
        %v805 = vmax.f32 %v667, 0.0
        %v806 = vmax.f32 %v669, 0.0
        %v807 = vmax.f32 %v672, 0.0
        %v808 = vmax.f32 %v674, 0.0
        %v809 = vmax.f32 %v677, 0.0
        %v810 = vmax.f32 %v679, 0.0
        %v811 = vmax.f32 %v682, 0.0
        %v812 = vmax.f32 %v684, 0.0
        %v813 = vmax.f32 %v687, 0.0
        %v814 = vmax.f32 %v689, 0.0
        %v815 = vmax.f32 %v692, 0.0
        %v816 = vmax.f32 %v694, 0.0
        %v817 = vmax.f32 %v697, 0.0
        %v818 = vmax.f32 %v699, 0.0
        %v819 = vmax.f32 %v702, 0.0
        %v820 = vmax.f32 %v704, 0.0
        %v821 = vmax.f32 %v707, 0.0
        %v822 = vmax.f32 %v709, 0.0
        %v823 = vmax.f32 %v712, 0.0
        %v824 = vmax.f32 %v714, 0.0
        %v825 = vmax.f32 %v717, 0.0
        %v826 = vmax.f32 %v719, 0.0
        %v827 = vmax.f32 %v722, 0.0
        %v828 = vmax.f32 %v724, 0.0
        %v829 = vmax.f32 %v727, 0.0
        %v830 = vmax.f32 %v729, 0.0
        %v831 = vmax.f32 %v732, 0.0
        %v832 = vmax.f32 %v734, 0.0
        %v833 = vmax.f32 %v737, 0.0
        %v834 = vmax.f32 %v739, 0.0
        %v835 = vmax.f32 %v742, 0.0
        %v836 = vmax.f32 %v744, 0.0
        %v837 = vmax.f32 %v747, 0.0
        %v838 = vmax.f32 %v749, 0.0
        %v839 = vmax.f32 %v752, 0.0
        %v840 = vmax.f32 %v754, 0.0
        %v841 = vmax.f32 %v757, 0.0
        %v842 = vmax.f32 %v759, 0.0
        %v843 = vmax.f32 %v762, 0.0
        %v844 = vmax.f32 %v764, 0.0
        %v845 = vmax.f32 %v767, 0.0
        %v846 = vmax.f32 %v769, 0.0
        %v847 = vmax.f32 %v772, 0.0
        %v848 = vmax.f32 %v774, 0.0
        %v849 = vmax.f32 %v777, 0.0
        %v850 = vmax.f32 %v779, 0.0
        %v851 = vmax.f32 %v782, 0.0
        %v852 = vmax.f32 %v784, 0.0
        %v853 = vmax.f32 %v787, 0.0
        %v854 = vmax.f32 %v789, 0.0
        %v855 = vpack.c.bf16 %v792, %v791
        %v856 = vpack.c.bf16 %v794, %v793
        %v857 = vpack.c.bf16 %v796, %v795
        %v858 = vpack.c.bf16 %v798, %v797
        %v859 = vpack.c.bf16 %v800, %v799
        %v860 = vpack.c.bf16 %v802, %v801
        %v861 = vpack.c.bf16 %v804, %v803
        %v862 = vpack.c.bf16 %v806, %v805
        %v863 = vpack.c.bf16 %v808, %v807
        %v864 = vpack.c.bf16 %v810, %v809
        %v865 = vpack.c.bf16 %v812, %v811
        %v866 = vpack.c.bf16 %v814, %v813
        %v867 = vpack.c.bf16 %v816, %v815
        %v868 = vpack.c.bf16 %v818, %v817
        %v869 = vpack.c.bf16 %v820, %v819
        %v870 = vpack.c.bf16 %v822, %v821
        %v871 = vpack.c.bf16 %v824, %v823
        %v872 = vpack.c.bf16 %v826, %v825
        %v873 = vpack.c.bf16 %v828, %v827
        %v874 = vpack.c.bf16 %v830, %v829
        %v875 = vpack.c.bf16 %v832, %v831
        %v876 = vpack.c.bf16 %v834, %v833
        %v877 = vpack.c.bf16 %v836, %v835
        %v878 = vpack.c.bf16 %v838, %v837
        %v879 = vpack.c.bf16 %v840, %v839
        %v880 = vpack.c.bf16 %v842, %v841
        %v881 = vpack.c.bf16 %v844, %v843
        %v882 = vpack.c.bf16 %v846, %v845
        %v883 = vpack.c.bf16 %v848, %v847
        %v884 = vpack.c.bf16 %v850, %v849
        %v885 = vpack.c.bf16 %v852, %v851
        %v886 = vpack.c.bf16 %v854, %v853
        %v887 = vld [vmem:[%s3] sm:$0xf]
        %v888 = vld [vmem:[%s3 + $0x4] sm:$0xf]
        %v889 = vld [vmem:[%s3 + $0x8] sm:$0xf]
        %v890 = vld [vmem:[%s3 + $0xc] sm:$0xf]
        %v891 = vld [vmem:[%s4] sm:$0x1]
        %v893 = vperm.slane %v891, 0
        %v899 = vunpack.c.l.b16 %v887
        %v900 = vunpack.c.l.b16 %v888
        %v901 = vunpack.c.l.b16 %v889
        %v902 = vunpack.c.l.b16 %v890
        %v903 = vpack.c.b16 %v900, %v899
        %v904 = vpack.c.b16 %v902, %v901
        %v908 = vsel %vm525, %v855, 0
        %v911 = vsel %vm525, %v856, 0
        %v914 = vsel %vm525, %v857, 0
        %v917 = vsel %vm525, %v858, 0
        %v920 = vsel %vm525, %v859, 0
        %v923 = vsel %vm525, %v860, 0
        %v926 = vsel %vm525, %v861, 0
        %v929 = vsel %vm525, %v862, 0
        %v932 = vsel %vm525, %v863, 0
        %v935 = vsel %vm525, %v864, 0
        %v938 = vsel %vm525, %v865, 0
        %v941 = vsel %vm525, %v866, 0
        %v944 = vsel %vm525, %v867, 0
        %v947 = vsel %vm525, %v868, 0
        %v950 = vsel %vm525, %v869, 0
        %v953 = vsel %vm525, %v870, 0
        %v956 = vsel %vm525, %v871, 0
        %v959 = vsel %vm525, %v872, 0
        %v962 = vsel %vm525, %v873, 0
        %v965 = vsel %vm525, %v874, 0
        %v968 = vsel %vm525, %v875, 0
        %v971 = vsel %vm525, %v876, 0
        %v974 = vsel %vm525, %v877, 0
        %v977 = vsel %vm525, %v878, 0
        %v980 = vsel %vm525, %v879, 0
        %v983 = vsel %vm525, %v880, 0
        %v986 = vsel %vm525, %v881, 0
        %v989 = vsel %vm525, %v882, 0
        %v992 = vsel %vm525, %v883, 0
        %v995 = vsel %vm525, %v884, 0
        %v998 = vsel %vm525, %v885, 0
        %v1001 = vsel %vm525, %v886, 0
        %1003 = vmatpush.bf16.msra.mxu0 0
        %1004 = vmatpush.bf16.msra.mxu0 0
        %1005 = vmatpush.bf16.msra.mxu0 0
        %1006 = vmatpush.bf16.msra.mxu0 0
        %1007 = vmatpush.bf16.msra.mxu0 0
        %1008 = vmatpush.bf16.msra.mxu0 0
        %1009 = vmatpush.bf16.msra.mxu0 %v904
        %1010 = vmatpush.bf16.msra.mxu0 %v903
        %1011 = vmatmul.bf16.gmra.mxu0 %v908
        %v1012 = vpop.f32.mrf.mxu0
        %v1013 = vadd.f32 %v893, %v1012
        %v1014 = vpop.f32.mrf.mxu0
        %v1015 = vadd.f32 %v893, %v1014
        %1016 = vmatmul.bf16.gmra.mxu0 %v911
        %v1017 = vpop.f32.mrf.mxu0
        %v1018 = vadd.f32 %v893, %v1017
        %v1019 = vpop.f32.mrf.mxu0
        %v1020 = vadd.f32 %v893, %v1019
        %1021 = vmatmul.bf16.gmra.mxu0 %v914
        %v1022 = vpop.f32.mrf.mxu0
        %v1023 = vadd.f32 %v893, %v1022
        %v1024 = vpop.f32.mrf.mxu0
        %v1025 = vadd.f32 %v893, %v1024
        %1026 = vmatmul.bf16.gmra.mxu0 %v917
        %v1027 = vpop.f32.mrf.mxu0
        %v1028 = vadd.f32 %v893, %v1027
        %v1029 = vpop.f32.mrf.mxu0
        %v1030 = vadd.f32 %v893, %v1029
        %1031 = vmatmul.bf16.gmra.mxu0 %v920
        %v1032 = vpop.f32.mrf.mxu0
        %v1033 = vadd.f32 %v893, %v1032
        %v1034 = vpop.f32.mrf.mxu0
        %v1035 = vadd.f32 %v893, %v1034
        %1036 = vmatmul.bf16.gmra.mxu0 %v923
        %v1037 = vpop.f32.mrf.mxu0
        %v1038 = vadd.f32 %v893, %v1037
        %v1039 = vpop.f32.mrf.mxu0
        %v1040 = vadd.f32 %v893, %v1039
        %1041 = vmatmul.bf16.gmra.mxu0 %v926
        %v1042 = vpop.f32.mrf.mxu0
        %v1043 = vadd.f32 %v893, %v1042
        %v1044 = vpop.f32.mrf.mxu0
        %v1045 = vadd.f32 %v893, %v1044
        %1046 = vmatmul.bf16.gmra.mxu0 %v929
        %v1047 = vpop.f32.mrf.mxu0
        %v1048 = vadd.f32 %v893, %v1047
        %v1049 = vpop.f32.mrf.mxu0
        %v1050 = vadd.f32 %v893, %v1049
        %1051 = vmatmul.bf16.gmra.mxu0 %v932
        %v1052 = vpop.f32.mrf.mxu0
        %v1053 = vadd.f32 %v893, %v1052
        %v1054 = vpop.f32.mrf.mxu0
        %v1055 = vadd.f32 %v893, %v1054
        %1056 = vmatmul.bf16.gmra.mxu0 %v935
        %v1057 = vpop.f32.mrf.mxu0
        %v1058 = vadd.f32 %v893, %v1057
        %v1059 = vpop.f32.mrf.mxu0
        %v1060 = vadd.f32 %v893, %v1059
        %1061 = vmatmul.bf16.gmra.mxu0 %v938
        %v1062 = vpop.f32.mrf.mxu0
        %v1063 = vadd.f32 %v893, %v1062
        %v1064 = vpop.f32.mrf.mxu0
        %v1065 = vadd.f32 %v893, %v1064
        %1066 = vmatmul.bf16.gmra.mxu0 %v941
        %v1067 = vpop.f32.mrf.mxu0
        %v1068 = vadd.f32 %v893, %v1067
        %v1069 = vpop.f32.mrf.mxu0
        %v1070 = vadd.f32 %v893, %v1069
        %1071 = vmatmul.bf16.gmra.mxu0 %v944
        %v1072 = vpop.f32.mrf.mxu0
        %v1073 = vadd.f32 %v893, %v1072
        %v1074 = vpop.f32.mrf.mxu0
        %v1075 = vadd.f32 %v893, %v1074
        %1076 = vmatmul.bf16.gmra.mxu0 %v947
        %v1077 = vpop.f32.mrf.mxu0
        %v1078 = vadd.f32 %v893, %v1077
        %v1079 = vpop.f32.mrf.mxu0
        %v1080 = vadd.f32 %v893, %v1079
        %1081 = vmatmul.bf16.gmra.mxu0 %v950
        %v1082 = vpop.f32.mrf.mxu0
        %v1083 = vadd.f32 %v893, %v1082
        %v1084 = vpop.f32.mrf.mxu0
        %v1085 = vadd.f32 %v893, %v1084
        %1086 = vmatmul.bf16.gmra.mxu0 %v953
        %v1087 = vpop.f32.mrf.mxu0
        %v1088 = vadd.f32 %v893, %v1087
        %v1089 = vpop.f32.mrf.mxu0
        %v1090 = vadd.f32 %v893, %v1089
        %1091 = vmatmul.bf16.gmra.mxu0 %v956
        %v1092 = vpop.f32.mrf.mxu0
        %v1093 = vadd.f32 %v893, %v1092
        %v1094 = vpop.f32.mrf.mxu0
        %v1095 = vadd.f32 %v893, %v1094
        %1096 = vmatmul.bf16.gmra.mxu0 %v959
        %v1097 = vpop.f32.mrf.mxu0
        %v1098 = vadd.f32 %v893, %v1097
        %v1099 = vpop.f32.mrf.mxu0
        %v1100 = vadd.f32 %v893, %v1099
        %1101 = vmatmul.bf16.gmra.mxu0 %v962
        %v1102 = vpop.f32.mrf.mxu0
        %v1103 = vadd.f32 %v893, %v1102
        %v1104 = vpop.f32.mrf.mxu0
        %v1105 = vadd.f32 %v893, %v1104
        %1106 = vmatmul.bf16.gmra.mxu0 %v965
        %v1107 = vpop.f32.mrf.mxu0
        %v1108 = vadd.f32 %v893, %v1107
        %v1109 = vpop.f32.mrf.mxu0
        %v1110 = vadd.f32 %v893, %v1109
        %1111 = vmatmul.bf16.gmra.mxu0 %v968
        %v1112 = vpop.f32.mrf.mxu0
        %v1113 = vadd.f32 %v893, %v1112
        %v1114 = vpop.f32.mrf.mxu0
        %v1115 = vadd.f32 %v893, %v1114
        %1116 = vmatmul.bf16.gmra.mxu0 %v971
        %v1117 = vpop.f32.mrf.mxu0
        %v1118 = vadd.f32 %v893, %v1117
        %v1119 = vpop.f32.mrf.mxu0
        %v1120 = vadd.f32 %v893, %v1119
        %1121 = vmatmul.bf16.gmra.mxu0 %v974
        %v1122 = vpop.f32.mrf.mxu0
        %v1123 = vadd.f32 %v893, %v1122
        %v1124 = vpop.f32.mrf.mxu0
        %v1125 = vadd.f32 %v893, %v1124
        %1126 = vmatmul.bf16.gmra.mxu0 %v977
        %v1127 = vpop.f32.mrf.mxu0
        %v1128 = vadd.f32 %v893, %v1127
        %v1129 = vpop.f32.mrf.mxu0
        %v1130 = vadd.f32 %v893, %v1129
        %1131 = vmatmul.bf16.gmra.mxu0 %v980
        %v1132 = vpop.f32.mrf.mxu0
        %v1133 = vadd.f32 %v893, %v1132
        %v1134 = vpop.f32.mrf.mxu0
        %v1135 = vadd.f32 %v893, %v1134
        %1136 = vmatmul.bf16.gmra.mxu0 %v983
        %v1137 = vpop.f32.mrf.mxu0
        %v1138 = vadd.f32 %v893, %v1137
        %v1139 = vpop.f32.mrf.mxu0
        %v1140 = vadd.f32 %v893, %v1139
        %1141 = vmatmul.bf16.gmra.mxu0 %v986
        %v1142 = vpop.f32.mrf.mxu0
        %v1143 = vadd.f32 %v893, %v1142
        %v1144 = vpop.f32.mrf.mxu0
        %v1145 = vadd.f32 %v893, %v1144
        %1146 = vmatmul.bf16.gmra.mxu0 %v989
        %v1147 = vpop.f32.mrf.mxu0
        %v1148 = vadd.f32 %v893, %v1147
        %v1149 = vpop.f32.mrf.mxu0
        %v1150 = vadd.f32 %v893, %v1149
        %1151 = vmatmul.bf16.gmra.mxu0 %v992
        %v1152 = vpop.f32.mrf.mxu0
        %v1153 = vadd.f32 %v893, %v1152
        %v1154 = vpop.f32.mrf.mxu0
        %v1155 = vadd.f32 %v893, %v1154
        %1156 = vmatmul.bf16.gmra.mxu0 %v995
        %v1157 = vpop.f32.mrf.mxu0
        %v1158 = vadd.f32 %v893, %v1157
        %v1159 = vpop.f32.mrf.mxu0
        %v1160 = vadd.f32 %v893, %v1159
        %1161 = vmatmul.bf16.gmra.mxu0 %v998
        %v1162 = vpop.f32.mrf.mxu0
        %v1163 = vadd.f32 %v893, %v1162
        %v1164 = vpop.f32.mrf.mxu0
        %v1165 = vadd.f32 %v893, %v1164
        %1166 = vmatmul.bf16.gmra.mxu0 %v1001
        %v1167 = vpop.f32.mrf.mxu0
        %v1168 = vadd.f32 %v893, %v1167
        %v1169 = vpop.f32.mrf.mxu0
        %v1170 = vadd.f32 %v893, %v1169
        %1171 = vdwg.mxu0
        %v1172 = vmax.f32 %v1013, 0.0
        %v1173 = vmax.f32 %v1015, 0.0
        %v1174 = vmax.f32 %v1018, 0.0
        %v1175 = vmax.f32 %v1020, 0.0
        %v1176 = vmax.f32 %v1023, 0.0
        %v1177 = vmax.f32 %v1025, 0.0
        %v1178 = vmax.f32 %v1028, 0.0
        %v1179 = vmax.f32 %v1030, 0.0
        %v1180 = vmax.f32 %v1033, 0.0
        %v1181 = vmax.f32 %v1035, 0.0
        %v1182 = vmax.f32 %v1038, 0.0
        %v1183 = vmax.f32 %v1040, 0.0
        %v1184 = vmax.f32 %v1043, 0.0
        %v1185 = vmax.f32 %v1045, 0.0
        %v1186 = vmax.f32 %v1048, 0.0
        %v1187 = vmax.f32 %v1050, 0.0
        %v1188 = vmax.f32 %v1053, 0.0
        %v1189 = vmax.f32 %v1055, 0.0
        %v1190 = vmax.f32 %v1058, 0.0
        %v1191 = vmax.f32 %v1060, 0.0
        %v1192 = vmax.f32 %v1063, 0.0
        %v1193 = vmax.f32 %v1065, 0.0
        %v1194 = vmax.f32 %v1068, 0.0
        %v1195 = vmax.f32 %v1070, 0.0
        %v1196 = vmax.f32 %v1073, 0.0
        %v1197 = vmax.f32 %v1075, 0.0
        %v1198 = vmax.f32 %v1078, 0.0
        %v1199 = vmax.f32 %v1080, 0.0
        %v1200 = vmax.f32 %v1083, 0.0
        %v1201 = vmax.f32 %v1085, 0.0
        %v1202 = vmax.f32 %v1088, 0.0
        %v1203 = vmax.f32 %v1090, 0.0
        %v1204 = vmax.f32 %v1093, 0.0
        %v1205 = vmax.f32 %v1095, 0.0
        %v1206 = vmax.f32 %v1098, 0.0
        %v1207 = vmax.f32 %v1100, 0.0
        %v1208 = vmax.f32 %v1103, 0.0
        %v1209 = vmax.f32 %v1105, 0.0
        %v1210 = vmax.f32 %v1108, 0.0
        %v1211 = vmax.f32 %v1110, 0.0
        %v1212 = vmax.f32 %v1113, 0.0
        %v1213 = vmax.f32 %v1115, 0.0
        %v1214 = vmax.f32 %v1118, 0.0
        %v1215 = vmax.f32 %v1120, 0.0
        %v1216 = vmax.f32 %v1123, 0.0
        %v1217 = vmax.f32 %v1125, 0.0
        %v1218 = vmax.f32 %v1128, 0.0
        %v1219 = vmax.f32 %v1130, 0.0
        %v1220 = vmax.f32 %v1133, 0.0
        %v1221 = vmax.f32 %v1135, 0.0
        %v1222 = vmax.f32 %v1138, 0.0
        %v1223 = vmax.f32 %v1140, 0.0
        %v1224 = vmax.f32 %v1143, 0.0
        %v1225 = vmax.f32 %v1145, 0.0
        %v1226 = vmax.f32 %v1148, 0.0
        %v1227 = vmax.f32 %v1150, 0.0
        %v1228 = vmax.f32 %v1153, 0.0
        %v1229 = vmax.f32 %v1155, 0.0
        %v1230 = vmax.f32 %v1158, 0.0
        %v1231 = vmax.f32 %v1160, 0.0
        %v1232 = vmax.f32 %v1163, 0.0
        %v1233 = vmax.f32 %v1165, 0.0
        %v1234 = vmax.f32 %v1168, 0.0
        %v1235 = vmax.f32 %v1170, 0.0
        %v1236 = vpack.c.bf16 %v1173, %v1172
        %v1237 = vpack.c.bf16 %v1175, %v1174
        %v1238 = vpack.c.bf16 %v1177, %v1176
        %v1239 = vpack.c.bf16 %v1179, %v1178
        %v1240 = vpack.c.bf16 %v1181, %v1180
        %v1241 = vpack.c.bf16 %v1183, %v1182
        %v1242 = vpack.c.bf16 %v1185, %v1184
        %v1243 = vpack.c.bf16 %v1187, %v1186
        %v1244 = vpack.c.bf16 %v1189, %v1188
        %v1245 = vpack.c.bf16 %v1191, %v1190
        %v1246 = vpack.c.bf16 %v1193, %v1192
        %v1247 = vpack.c.bf16 %v1195, %v1194
        %v1248 = vpack.c.bf16 %v1197, %v1196
        %v1249 = vpack.c.bf16 %v1199, %v1198
        %v1250 = vpack.c.bf16 %v1201, %v1200
        %v1251 = vpack.c.bf16 %v1203, %v1202
        %v1252 = vpack.c.bf16 %v1205, %v1204
        %v1253 = vpack.c.bf16 %v1207, %v1206
        %v1254 = vpack.c.bf16 %v1209, %v1208
        %v1255 = vpack.c.bf16 %v1211, %v1210
        %v1256 = vpack.c.bf16 %v1213, %v1212
        %v1257 = vpack.c.bf16 %v1215, %v1214
        %v1258 = vpack.c.bf16 %v1217, %v1216
        %v1259 = vpack.c.bf16 %v1219, %v1218
        %v1260 = vpack.c.bf16 %v1221, %v1220
        %v1261 = vpack.c.bf16 %v1223, %v1222
        %v1262 = vpack.c.bf16 %v1225, %v1224
        %v1263 = vpack.c.bf16 %v1227, %v1226
        %v1264 = vpack.c.bf16 %v1229, %v1228
        %v1265 = vpack.c.bf16 %v1231, %v1230
        %v1266 = vpack.c.bf16 %v1233, %v1232
        %v1267 = vpack.c.bf16 %v1235, %v1234
        %v1268 = vld [vmem:[%s5] sm:$0xf]
        %v1269 = vld [vmem:[%s5 + $0x4] sm:$0xf]
        %v1270 = vld [vmem:[%s5 + $0x8] sm:$0xf]
        %v1271 = vld [vmem:[%s5 + $0xc] sm:$0xf]
        %v1272 = vld [vmem:[%s6] sm:$0x1]
        %v1274 = vperm.slane %v1272, 0
        %v1280 = vunpack.c.l.b16 %v1268
        %v1281 = vunpack.c.l.b16 %v1269
        %v1282 = vunpack.c.l.b16 %v1270
        %v1283 = vunpack.c.l.b16 %v1271
        %v1284 = vpack.c.b16 %v1281, %v1280
        %v1285 = vpack.c.b16 %v1283, %v1282
        %v1289 = vsel %vm525, %v1236, 0
        %v1292 = vsel %vm525, %v1237, 0
        %v1295 = vsel %vm525, %v1238, 0
        %v1298 = vsel %vm525, %v1239, 0
        %v1301 = vsel %vm525, %v1240, 0
        %v1304 = vsel %vm525, %v1241, 0
        %v1307 = vsel %vm525, %v1242, 0
        %v1310 = vsel %vm525, %v1243, 0
        %v1313 = vsel %vm525, %v1244, 0
        %v1316 = vsel %vm525, %v1245, 0
        %v1319 = vsel %vm525, %v1246, 0
        %v1322 = vsel %vm525, %v1247, 0
        %v1325 = vsel %vm525, %v1248, 0
        %v1328 = vsel %vm525, %v1249, 0
        %v1331 = vsel %vm525, %v1250, 0
        %v1334 = vsel %vm525, %v1251, 0
        %v1337 = vsel %vm525, %v1252, 0
        %v1340 = vsel %vm525, %v1253, 0
        %v1343 = vsel %vm525, %v1254, 0
        %v1346 = vsel %vm525, %v1255, 0
        %v1349 = vsel %vm525, %v1256, 0
        %v1352 = vsel %vm525, %v1257, 0
        %v1355 = vsel %vm525, %v1258, 0
        %v1358 = vsel %vm525, %v1259, 0
        %v1361 = vsel %vm525, %v1260, 0
        %v1364 = vsel %vm525, %v1261, 0
        %v1367 = vsel %vm525, %v1262, 0
        %v1370 = vsel %vm525, %v1263, 0
        %v1373 = vsel %vm525, %v1264, 0
        %v1376 = vsel %vm525, %v1265, 0
        %v1379 = vsel %vm525, %v1266, 0
        %v1382 = vsel %vm525, %v1267, 0
        %1384 = vmatpush.bf16.msra.mxu0 0
        %1385 = vmatpush.bf16.msra.mxu0 0
        %1386 = vmatpush.bf16.msra.mxu0 0
        %1387 = vmatpush.bf16.msra.mxu0 0
        %1388 = vmatpush.bf16.msra.mxu0 0
        %1389 = vmatpush.bf16.msra.mxu0 0
        %1390 = vmatpush.bf16.msra.mxu0 %v1285
        %1391 = vmatpush.bf16.msra.mxu0 %v1284
        %1392 = vmatmul.bf16.gmra.mxu0 %v1289
        %v1393 = vpop.f32.mrf.mxu0
        %v1394 = vadd.f32 %v1274, %v1393
        %v1395 = vpop.f32.mrf.mxu0
        %v1396 = vadd.f32 %v1274, %v1395
        %1397 = vmatmul.bf16.gmra.mxu0 %v1292
        %v1398 = vpop.f32.mrf.mxu0
        %v1399 = vadd.f32 %v1274, %v1398
        %v1400 = vpop.f32.mrf.mxu0
        %v1401 = vadd.f32 %v1274, %v1400
        %1402 = vmatmul.bf16.gmra.mxu0 %v1295
        %v1403 = vpop.f32.mrf.mxu0
        %v1404 = vadd.f32 %v1274, %v1403
        %v1405 = vpop.f32.mrf.mxu0
        %v1406 = vadd.f32 %v1274, %v1405
        %1407 = vmatmul.bf16.gmra.mxu0 %v1298
        %v1408 = vpop.f32.mrf.mxu0
        %v1409 = vadd.f32 %v1274, %v1408
        %v1410 = vpop.f32.mrf.mxu0
        %v1411 = vadd.f32 %v1274, %v1410
        %1412 = vmatmul.bf16.gmra.mxu0 %v1301
        %v1413 = vpop.f32.mrf.mxu0
        %v1414 = vadd.f32 %v1274, %v1413
        %v1415 = vpop.f32.mrf.mxu0
        %v1416 = vadd.f32 %v1274, %v1415
        %1417 = vmatmul.bf16.gmra.mxu0 %v1304
        %v1418 = vpop.f32.mrf.mxu0
        %v1419 = vadd.f32 %v1274, %v1418
        %v1420 = vpop.f32.mrf.mxu0
        %v1421 = vadd.f32 %v1274, %v1420
        %1422 = vmatmul.bf16.gmra.mxu0 %v1307
        %v1423 = vpop.f32.mrf.mxu0
        %v1424 = vadd.f32 %v1274, %v1423
        %v1425 = vpop.f32.mrf.mxu0
        %v1426 = vadd.f32 %v1274, %v1425
        %1427 = vmatmul.bf16.gmra.mxu0 %v1310
        %v1428 = vpop.f32.mrf.mxu0
        %v1429 = vadd.f32 %v1274, %v1428
        %v1430 = vpop.f32.mrf.mxu0
        %v1431 = vadd.f32 %v1274, %v1430
        %1432 = vmatmul.bf16.gmra.mxu0 %v1313
        %v1433 = vpop.f32.mrf.mxu0
        %v1434 = vadd.f32 %v1274, %v1433
        %v1435 = vpop.f32.mrf.mxu0
        %v1436 = vadd.f32 %v1274, %v1435
        %1437 = vmatmul.bf16.gmra.mxu0 %v1316
        %v1438 = vpop.f32.mrf.mxu0
        %v1439 = vadd.f32 %v1274, %v1438
        %v1440 = vpop.f32.mrf.mxu0
        %v1441 = vadd.f32 %v1274, %v1440
        %1442 = vmatmul.bf16.gmra.mxu0 %v1319
        %v1443 = vpop.f32.mrf.mxu0
        %v1444 = vadd.f32 %v1274, %v1443
        %v1445 = vpop.f32.mrf.mxu0
        %v1446 = vadd.f32 %v1274, %v1445
        %1447 = vmatmul.bf16.gmra.mxu0 %v1322
        %v1448 = vpop.f32.mrf.mxu0
        %v1449 = vadd.f32 %v1274, %v1448
        %v1450 = vpop.f32.mrf.mxu0
        %v1451 = vadd.f32 %v1274, %v1450
        %1452 = vmatmul.bf16.gmra.mxu0 %v1325
        %v1453 = vpop.f32.mrf.mxu0
        %v1454 = vadd.f32 %v1274, %v1453
        %v1455 = vpop.f32.mrf.mxu0
        %v1456 = vadd.f32 %v1274, %v1455
        %1457 = vmatmul.bf16.gmra.mxu0 %v1328
        %v1458 = vpop.f32.mrf.mxu0
        %v1459 = vadd.f32 %v1274, %v1458
        %v1460 = vpop.f32.mrf.mxu0
        %v1461 = vadd.f32 %v1274, %v1460
        %1462 = vmatmul.bf16.gmra.mxu0 %v1331
        %v1463 = vpop.f32.mrf.mxu0
        %v1464 = vadd.f32 %v1274, %v1463
        %v1465 = vpop.f32.mrf.mxu0
        %v1466 = vadd.f32 %v1274, %v1465
        %1467 = vmatmul.bf16.gmra.mxu0 %v1334
        %v1468 = vpop.f32.mrf.mxu0
        %v1469 = vadd.f32 %v1274, %v1468
        %v1470 = vpop.f32.mrf.mxu0
        %v1471 = vadd.f32 %v1274, %v1470
        %1472 = vmatmul.bf16.gmra.mxu0 %v1337
        %v1473 = vpop.f32.mrf.mxu0
        %v1474 = vadd.f32 %v1274, %v1473
        %v1475 = vpop.f32.mrf.mxu0
        %v1476 = vadd.f32 %v1274, %v1475
        %1477 = vmatmul.bf16.gmra.mxu0 %v1340
        %v1478 = vpop.f32.mrf.mxu0
        %v1479 = vadd.f32 %v1274, %v1478
        %v1480 = vpop.f32.mrf.mxu0
        %v1481 = vadd.f32 %v1274, %v1480
        %1482 = vmatmul.bf16.gmra.mxu0 %v1343
        %v1483 = vpop.f32.mrf.mxu0
        %v1484 = vadd.f32 %v1274, %v1483
        %v1485 = vpop.f32.mrf.mxu0
        %v1486 = vadd.f32 %v1274, %v1485
        %1487 = vmatmul.bf16.gmra.mxu0 %v1346
        %v1488 = vpop.f32.mrf.mxu0
        %v1489 = vadd.f32 %v1274, %v1488
        %v1490 = vpop.f32.mrf.mxu0
        %v1491 = vadd.f32 %v1274, %v1490
        %1492 = vmatmul.bf16.gmra.mxu0 %v1349
        %v1493 = vpop.f32.mrf.mxu0
        %v1494 = vadd.f32 %v1274, %v1493
        %v1495 = vpop.f32.mrf.mxu0
        %v1496 = vadd.f32 %v1274, %v1495
        %1497 = vmatmul.bf16.gmra.mxu0 %v1352
        %v1498 = vpop.f32.mrf.mxu0
        %v1499 = vadd.f32 %v1274, %v1498
        %v1500 = vpop.f32.mrf.mxu0
        %v1501 = vadd.f32 %v1274, %v1500
        %1502 = vmatmul.bf16.gmra.mxu0 %v1355
        %v1503 = vpop.f32.mrf.mxu0
        %v1504 = vadd.f32 %v1274, %v1503
        %v1505 = vpop.f32.mrf.mxu0
        %v1506 = vadd.f32 %v1274, %v1505
        %1507 = vmatmul.bf16.gmra.mxu0 %v1358
        %v1508 = vpop.f32.mrf.mxu0
        %v1509 = vadd.f32 %v1274, %v1508
        %v1510 = vpop.f32.mrf.mxu0
        %v1511 = vadd.f32 %v1274, %v1510
        %1512 = vmatmul.bf16.gmra.mxu0 %v1361
        %v1513 = vpop.f32.mrf.mxu0
        %v1514 = vadd.f32 %v1274, %v1513
        %v1515 = vpop.f32.mrf.mxu0
        %v1516 = vadd.f32 %v1274, %v1515
        %1517 = vmatmul.bf16.gmra.mxu0 %v1364
        %v1518 = vpop.f32.mrf.mxu0
        %v1519 = vadd.f32 %v1274, %v1518
        %v1520 = vpop.f32.mrf.mxu0
        %v1521 = vadd.f32 %v1274, %v1520
        %1522 = vmatmul.bf16.gmra.mxu0 %v1367
        %v1523 = vpop.f32.mrf.mxu0
        %v1524 = vadd.f32 %v1274, %v1523
        %v1525 = vpop.f32.mrf.mxu0
        %v1526 = vadd.f32 %v1274, %v1525
        %1527 = vmatmul.bf16.gmra.mxu0 %v1370
        %v1528 = vpop.f32.mrf.mxu0
        %v1529 = vadd.f32 %v1274, %v1528
        %v1530 = vpop.f32.mrf.mxu0
        %v1531 = vadd.f32 %v1274, %v1530
        %1532 = vmatmul.bf16.gmra.mxu0 %v1373
        %v1533 = vpop.f32.mrf.mxu0
        %v1534 = vadd.f32 %v1274, %v1533
        %v1535 = vpop.f32.mrf.mxu0
        %v1536 = vadd.f32 %v1274, %v1535
        %1537 = vmatmul.bf16.gmra.mxu0 %v1376
        %v1538 = vpop.f32.mrf.mxu0
        %v1539 = vadd.f32 %v1274, %v1538
        %v1540 = vpop.f32.mrf.mxu0
        %v1541 = vadd.f32 %v1274, %v1540
        %1542 = vmatmul.bf16.gmra.mxu0 %v1379
        %v1543 = vpop.f32.mrf.mxu0
        %v1544 = vadd.f32 %v1274, %v1543
        %v1545 = vpop.f32.mrf.mxu0
        %v1546 = vadd.f32 %v1274, %v1545
        %1547 = vmatmul.bf16.gmra.mxu0 %v1382
        %v1548 = vpop.f32.mrf.mxu0
        %v1549 = vadd.f32 %v1274, %v1548
        %v1550 = vpop.f32.mrf.mxu0
        %v1551 = vadd.f32 %v1274, %v1550
        %1552 = vdwg.mxu0
        %1553 = vst [vmem:[%s272] sm:$0xff] %v1394
        %1554 = vst [vmem:[%s272 + $0x8] sm:$0xff] %v1396
        %1555 = vst [vmem:[%s272 + $0x10] sm:$0xff] %v1399
        %1556 = vst [vmem:[%s272 + $0x18] sm:$0xff] %v1401
        %1557 = vst [vmem:[%s272 + $0x20] sm:$0xff] %v1404
        %1558 = vst [vmem:[%s272 + $0x28] sm:$0xff] %v1406
        %1559 = vst [vmem:[%s272 + $0x30] sm:$0xff] %v1409
        %1560 = vst [vmem:[%s272 + $0x38] sm:$0xff] %v1411
        %1561 = vst [vmem:[%s272 + $0x40] sm:$0xff] %v1414
        %1562 = vst [vmem:[%s272 + $0x48] sm:$0xff] %v1416
        %1563 = vst [vmem:[%s272 + $0x50] sm:$0xff] %v1419
        %1564 = vst [vmem:[%s272 + $0x58] sm:$0xff] %v1421
        %1565 = vst [vmem:[%s272 + $0x60] sm:$0xff] %v1424
        %1566 = vst [vmem:[%s272 + $0x68] sm:$0xff] %v1426
        %1567 = vst [vmem:[%s272 + $0x70] sm:$0xff] %v1429
        %1568 = vst [vmem:[%s272 + $0x78] sm:$0xff] %v1431
        %1569 = vst [vmem:[%s272 + $0x80] sm:$0xff] %v1434
        %1570 = vst [vmem:[%s272 + $0x88] sm:$0xff] %v1436
        %1571 = vst [vmem:[%s272 + $0x90] sm:$0xff] %v1439
        %1572 = vst [vmem:[%s272 + $0x98] sm:$0xff] %v1441
        %1573 = vst [vmem:[%s272 + $0xa0] sm:$0xff] %v1444
        %1574 = vst [vmem:[%s272 + $0xa8] sm:$0xff] %v1446
        %1575 = vst [vmem:[%s272 + $0xb0] sm:$0xff] %v1449
        %1576 = vst [vmem:[%s272 + $0xb8] sm:$0xff] %v1451
        %1577 = vst [vmem:[%s272 + $0xc0] sm:$0xff] %v1454
        %1578 = vst [vmem:[%s272 + $0xc8] sm:$0xff] %v1456
        %1579 = vst [vmem:[%s272 + $0xd0] sm:$0xff] %v1459
        %1580 = vst [vmem:[%s272 + $0xd8] sm:$0xff] %v1461
        %1581 = vst [vmem:[%s272 + $0xe0] sm:$0xff] %v1464
        %1582 = vst [vmem:[%s272 + $0xe8] sm:$0xff] %v1466
        %1583 = vst [vmem:[%s272 + $0xf0] sm:$0xff] %v1469
        %1584 = vst [vmem:[%s272 + $0xf8] sm:$0xff] %v1471
        %1585 = vst [vmem:[%s272 + $0x100] sm:$0xff] %v1474
        %1586 = vst [vmem:[%s272 + $0x108] sm:$0xff] %v1476
        %1587 = vst [vmem:[%s272 + $0x110] sm:$0xff] %v1479
        %1588 = vst [vmem:[%s272 + $0x118] sm:$0xff] %v1481
        %1589 = vst [vmem:[%s272 + $0x120] sm:$0xff] %v1484
        %1590 = vst [vmem:[%s272 + $0x128] sm:$0xff] %v1486
        %1591 = vst [vmem:[%s272 + $0x130] sm:$0xff] %v1489
        %1592 = vst [vmem:[%s272 + $0x138] sm:$0xff] %v1491
        %1593 = vst [vmem:[%s272 + $0x140] sm:$0xff] %v1494
        %1594 = vst [vmem:[%s272 + $0x148] sm:$0xff] %v1496
        %1595 = vst [vmem:[%s272 + $0x150] sm:$0xff] %v1499
        %1596 = vst [vmem:[%s272 + $0x158] sm:$0xff] %v1501
        %1597 = vst [vmem:[%s272 + $0x160] sm:$0xff] %v1504
        %1598 = vst [vmem:[%s272 + $0x168] sm:$0xff] %v1506
        %1599 = vst [vmem:[%s272 + $0x170] sm:$0xff] %v1509
        %1600 = vst [vmem:[%s272 + $0x178] sm:$0xff] %v1511
        %1601 = vst [vmem:[%s272 + $0x180] sm:$0xff] %v1514
        %1602 = vst [vmem:[%s272 + $0x188] sm:$0xff] %v1516
        %1603 = vst [vmem:[%s272 + $0x190] sm:$0xff] %v1519
        %1604 = vst [vmem:[%s272 + $0x198] sm:$0xff] %v1521
        %1605 = vst [vmem:[%s272 + $0x1a0] sm:$0xff] %v1524
        %1606 = vst [vmem:[%s272 + $0x1a8] sm:$0xff] %v1526
        %1607 = vst [vmem:[%s272 + $0x1b0] sm:$0xff] %v1529
        %1608 = vst [vmem:[%s272 + $0x1b8] sm:$0xff] %v1531
        %1609 = vst [vmem:[%s272 + $0x1c0] sm:$0xff] %v1534
        %1610 = vst [vmem:[%s272 + $0x1c8] sm:$0xff] %v1536
        %1611 = vst [vmem:[%s272 + $0x1d0] sm:$0xff] %v1539
        %1612 = vst [vmem:[%s272 + $0x1d8] sm:$0xff] %v1541
        %1613 = vst [vmem:[%s272 + $0x1e0] sm:$0xff] %v1544
        %1614 = vst [vmem:[%s272 + $0x1e8] sm:$0xff] %v1546
        %1615 = vst [vmem:[%s272 + $0x1f0] sm:$0xff] %v1549
        %1616 = vst [vmem:[%s272 + $0x1f8] sm:$0xff] %v1551
        %s1617 = sand.u32 %s181, 1
        %s1618 = scalar_lea.sflag [#allocation3], %s1617
        %s1619 = sand.u32 %s181, 1
        %s1620 = smul.addr %s1619, 512
        %s1621 = scalar_lea.vmem [#allocation2], %s1620
        // Predicated region
        $region49: #{tpu_custom_call.1} parent=47 // pred_check
          %p1622 = pneg %p191
        $region50: #{tpu_custom_call.1} parent=47 // pred_check_branch
          %1624 = sbr.rel (%p1622) target = $region52
        $region51: #{tpu_custom_call.1} parent=47 // pred_region
          %s1625 = smul.u32 64, %s21
          %1627 = vsyncadd %s1618, 0
          %s1628 = smul.addr %s1625, 8
          %s1629 = scalar_lea.hbm %s7, %s1628
          %s1630 = sshll.u32 %s1621, 4
          %s1631 = int_to_ptr.vmem [resolvable:$true] %s1630
          %s1632 = sshll.u32 %s1629, 4
          %s1633 = int_to_ptr.hbm [resolvable:$true] %s1632
          %1638 = dma.vmem_to_hbm [thread:$0]  %s1631, 8192, %s1633, %s1618, 128, 128, 8
        $region52: #{tpu_custom_call.1} parent=47 // pred_fallthru
          _
      $region48: #{tpu_custom_call.1} parent=5 // pred_fallthru
        _
      %p1639 = scmp.le.s32.totalorder 2, %s16
      // Predicated region
      $region53: #{tpu_custom_call.1} parent=5 // pred_check
        %p1640 = pneg %p1639
      $region54: #{tpu_custom_call.1} parent=5 // pred_check_branch
        %1642 = sbr.rel (%p1640) target = $region56
      $region55: #{tpu_custom_call.1} parent=5 // pred_region
        %s1643 = ssub.s32 %s16, 2
        // Predicated region
        $region57: #{tpu_custom_call.1} parent=55 // pred_check
          %p1644 = pneg %p197
        $region58: #{tpu_custom_call.1} parent=55 // pred_check_branch
          %1646 = sbr.rel (%p1644) target = $region60
        $region59: #{tpu_custom_call.1} parent=55 // pred_region
          %s1647 = sand.u32 %s182, 1
          %s1648 = scalar_lea.sflag [#allocation3], %s1647
          %s1649 = sand.u32 %s182, 1
          %s1650 = smul.addr %s1649, 512
          %s1651 = scalar_lea.vmem [#allocation2], %s1650
          %1653 = dma.done %s1648, 8192
        $region60: #{tpu_custom_call.1} parent=55 // pred_fallthru
          _
      $region56: #{tpu_custom_call.1} parent=5 // pred_fallthru
        _
    $region6: #{tpu_custom_call.1} parent=1 // loop_footer
      %s20 = sadd.s32 1, %s16
    $region7: #{tpu_custom_call.1} parent=1 // loop_footer_branch
      %15 = sbr.rel target = $region3
    $region8: #{tpu_custom_call.1} parent=1 // loop_exit
      _
    %1654 = vsyncpa [#allocation3], 1
    %s1655 = scalar_lea.sflag [#allocation3], 1
    %1656 = vsyncpa %s1655, 1

</llo_original>
